<compile_context>
chip_gen: v7x
topology: tpu7x:2x2x1
jax: 0.10.0
libtpu: 0.0.40
codegen_flags: <defaults>
</compile_context>

<pallas_src>
import jax
import jax.numpy as jnp
from jax.experimental import pallas as pl
from jax.experimental.pallas import tpu as pltpu


# ----------------------------------------------------------------------------
# Kernel
# ----------------------------------------------------------------------------
def _mlp_kernel(x_ref, w0_ref, b0_ref, w1_ref, b1_ref, w2_ref, b2_ref, o_ref):
    # x arrives f32; the VPU cast to bf16 is free filler on an MXU-bound body.
    x = x_ref[...].astype(w0_ref.dtype)
    # Layer 0: bf16 operands on the MXU, f32 accumulation; bias + ReLU in f32.
    h = jnp.dot(x, w0_ref[...], preferred_element_type=jnp.float32)
    h = jnp.maximum(h + b0_ref[...], 0.0)
    # Layer 1 (+ ReLU).  Intermediate activations are cast to bf16 (documented
    # precision trade-off).
    h = jnp.dot(h.astype(w1_ref.dtype), w1_ref[...],
                preferred_element_type=jnp.float32)
    h = jnp.maximum(h + b1_ref[...], 0.0)
    # Output layer (logits, no activation).
    logits = jnp.dot(h.astype(w2_ref.dtype), w2_ref[...],
                     preferred_element_type=jnp.float32)
    o_ref[...] = (logits + b2_ref[...]).astype(o_ref.dtype)


# ----------------------------------------------------------------------------
# Parameter preparation (one-time)
# ----------------------------------------------------------------------------
def _block_diag(w, pack):
    """pack copies of w on the diagonal: (din, dout) -> (pack*din, pack*dout)."""
    if pack == 1:
        return w
    din, dout = w.shape
    out = jnp.zeros((pack * din, pack * dout), w.dtype)
    for k in range(pack):
        out = out.at[k * din:(k + 1) * din, k * dout:(k + 1) * dout].set(w)
    return out


def default_pack_factor(batch):
    """Batch-packing factor per TPU generation.

    v5e (128x128 MXU): 2-way keeps packed K,N <= 128 (no extra MXU passes).
    v6e / v7x (2x256x256 MXU): 4-way keeps packed K,N <= 256.
    Falls back to the largest power-of-two factor dividing the batch.
    """
    kind = jax.devices()[0].device_kind.lower()
    pack = 2 if "v5" in kind else 4
    while pack > 1 and batch % pack:
        pack //= 2
    return pack


def pack_params(params, pack):
    """One-time prep: cast weights to bf16, build block-diagonal packed
    weights and pack-tiled f32 biases.  Do NOT call this per forward pass."""
    w0, b0 = params["w0"], params["b0"]
    w1, b1 = params["w1"], params["b1"]
    w2, b2 = params["w2"], params["b2"]
    d_in, h0 = w0.shape
    h1 = w1.shape[1]
    d_out = w2.shape[1]

    def bd(w):
        return _block_diag(w.astype(jnp.bfloat16), pack)

    def tile_bias(b):
        return jnp.tile(b.astype(jnp.float32), (1, pack))

    return {
        "pack": pack,
        "dims": (d_in, h0, h1, d_out),
        "w0": bd(w0), "b0": tile_bias(b0),
        "w1": bd(w1), "b1": tile_bias(b1),
        "w2": bd(w2), "b2": tile_bias(b2),
    }


# ----------------------------------------------------------------------------
# Tiling
# ----------------------------------------------------------------------------
def _pick_batch_tile(B_p, max_tile=4096):
    """Pick the packed-row batch tile.

    Goals: tiles as large as possible (amortize the ~0.35 us per-step
    overhead), an even step count >= 2 whenever the batch can be split into
    two sublane-aligned halves (v7x megacore load balance), and tb % 8 == 0
    so the (8,128) BlockSpec rule holds.  The last grid step may be partial;
    Pallas pads the input block and masks the output write-back, which is
    correct for this purely row-wise computation.
    """
    if B_p < 16:
        # Too small to split into two multiple-of-8 tiles: single full step.
        return B_p
    steps = 2
    while pl.cdiv(B_p, steps) > max_tile:
        steps += 2                      # keep the step count even
    tb = -(-B_p // steps)               # ceil
    tb = ((tb + 7) // 8) * 8            # sublane-aligned
    return tb


# ----------------------------------------------------------------------------
# Forward
# ----------------------------------------------------------------------------
def vb_menn_forward(x, packed, *, batch_tile=None):
    """VB-MENN deterministic (mean-parameter) forward pass, fused in one kernel.

    x:      (B, d_in) float32.
    packed: output of pack_params() (block-diagonal bf16 weights, f32 biases).
    Returns (B, d_out) logits in x.dtype.
    """
    B, d_in = x.shape
    pack = packed["pack"]
    d_in_p, h0_p, h1_p, d_out_p = packed["dims"]
    assert d_in == d_in_p, "input feature dim mismatch"
    assert B % pack == 0, f"batch {B} must be divisible by pack factor {pack}"

    B_p = B // pack
    # Free, contiguous row-major view: packed row r holds rows pack*r..pack*r+pack-1.
    x_p = x.reshape(B_p, pack * d_in)

    w0, b0 = packed["w0"], packed["b0"]
    w1, b1 = packed["w1"], packed["b1"]
    w2, b2 = packed["w2"], packed["b2"]
    K0, N0 = w0.shape
    N1 = w1.shape[1]
    N2 = w2.shape[1]          # = pack * d_out

    tb = _pick_batch_tile(B_p) if batch_tile is None else batch_tile
    assert tb == B_p or tb % 8 == 0, (
        "batch_tile must equal the packed batch or be a multiple of 8")
    grid = (pl.cdiv(B_p, tb),)

    # All three (block-diagonal) weight matrices stay fully VMEM-resident
    # (~0.2 MiB at these dims).  If hidden dims grow past ~2K, tile the
    # output-feature (N) dim with extra grid axes instead.
    flops = 2 * B * (d_in_p * h0_p + h0_p * h1_p + h1_p * d_out_p)
    bytes_accessed = (
        x_p.size * 4
        + (w0.size + w1.size + w2.size) * 2
        + (b0.size + b1.size + b2.size) * 4
        + B_p * N2 * x.dtype.itemsize)
    cost = pl.CostEstimate(flops=flops, transcendentals=0,
                           bytes_accessed=bytes_accessed)

    in_specs = [
        pl.BlockSpec((tb, K0), lambda i: (i, 0)),      # packed x tile (f32)
        pl.BlockSpec((K0, N0), lambda i: (0, 0)),      # W0 block-diag (full)
        pl.BlockSpec((1, N0), lambda i: (0, 0)),       # b0 tiled
        pl.BlockSpec((N0, N1), lambda i: (0, 0)),      # W1 block-diag (full)
        pl.BlockSpec((1, N1), lambda i: (0, 0)),       # b1 tiled
        pl.BlockSpec((N1, N2), lambda i: (0, 0)),      # W2 block-diag (full)
        pl.BlockSpec((1, N2), lambda i: (0, 0)),       # b2 tiled
    ]

    out_p = pl.pallas_call(
        _mlp_kernel,
        out_shape=jax.ShapeDtypeStruct((B_p, N2), x.dtype),
        grid_spec=pltpu.PrefetchScalarGridSpec(
            num_scalar_prefetch=0,
            grid=grid,
            in_specs=in_specs,
            out_specs=pl.BlockSpec((tb, N2), lambda i: (i, 0)),
        ),
        compiler_params=pltpu.CompilerParams(
            dimension_semantics=("parallel",)),
        cost_estimate=cost,
    )(x_p, w0, b0, w1, b1, w2, b2)

    # Free, contiguous reshape back to per-row logits.
    return out_p.reshape(B, d_out_p)


# ----------------------------------------------------------------------------
# Synthetic init + reference
# ----------------------------------------------------------------------------
def init_params(key, input_dim, hidden_dims, output_dim):
    """Deterministic synthetic init of the *mean* (mu) parameters of each
    BayesianLinear layer.  Weights are stored transposed: (in_dim, out_dim)."""
    dims = [input_dim] + list(hidden_dims) + [output_dim]
    names = ["0", "1", "2"]
    params = {}
    for n, (din, dout) in zip(names, zip(dims[:-1], dims[1:])):
        key, kw, kb = jax.random.split(key, 3)
        scale = 1.0 / jnp.sqrt(jnp.float32(din))
        params[f"w{n}"] = jax.random.uniform(
            kw, (din, dout), jnp.float32, minval=-scale, maxval=scale)
        params[f"b{n}"] = jax.random.uniform(
            kb, (1, dout), jnp.float32, minval=-scale, maxval=scale)
    return params


def _reference_forward(x, params):
    h = jnp.maximum(x @ params["w0"] + params["b0"], 0.0)
    h = jnp.maximum(h @ params["w1"] + params["b1"], 0.0)
    return h @ params["w2"] + params["b2"]


if __name__ == "__main__":
    # Small shapes consistent with the module: an MLP on (batch, input_dim).
    input_dim = 32
    hidden_dims = [64, 64]
    output_dim = 16
    batch = 8

    key = jax.random.PRNGKey(0)
    key, kx = jax.random.split(key)
    x = jax.random.normal(kx, (batch, input_dim), jnp.float32)
    params = init_params(key, input_dim, hidden_dims, output_dim)

    pack = default_pack_factor(batch)
    packed = pack_params(params, pack)          # one-time weight prep

    logits = jax.block_until_ready(vb_menn_forward(x, packed))
    ref = _reference_forward(x, params)
    assert logits.shape == (batch, output_dim)
    # bf16 weights/activations (f32 accumulation) loosen tolerance vs f32 ref.
    assert jnp.allclose(logits, ref, atol=5e-2, rtol=5e-2), "mismatch vs reference"

    # Also exercise the multi-step (tiled, even parallel-grid) path.
    key, kx2 = jax.random.split(key)
    big_batch = 4096
    x_big = jax.random.normal(kx2, (big_batch, input_dim), jnp.float32)
    pack_big = default_pack_factor(big_batch)
    packed_big = packed if pack_big == pack else pack_params(params, pack_big)
    logits_big = jax.block_until_ready(vb_menn_forward(x_big, packed_big))
    ref_big = _reference_forward(x_big, params)
    assert logits_big.shape == (big_batch, output_dim)
    assert jnp.allclose(logits_big, ref_big, atol=5e-2, rtol=5e-2), "tiled mismatch"

    print("KERNEL_OK")
</pallas_src>

<mosaic_0001>
module attributes {stable_mosaic.version = 11 : i64} {
  func.func @_mlp_kernel(%arg0: i32, %arg1: memref<2x128xf32, #tpu.memory_space<vmem>>, %arg2: memref<128x256xbf16, #tpu.memory_space<vmem>>, %arg3: memref<1x256xf32, #tpu.memory_space<vmem>>, %arg4: memref<256x256xbf16, #tpu.memory_space<vmem>>, %arg5: memref<1x256xf32, #tpu.memory_space<vmem>>, %arg6: memref<256x64xbf16, #tpu.memory_space<vmem>>, %arg7: memref<1x64xf32, #tpu.memory_space<vmem>>, %arg8: memref<2x64xf32, #tpu.memory_space<vmem>>) attributes {dimension_semantics = [#tpu.dimension_semantics<parallel>], iteration_bounds = array<i64: 1>, scalar_prefetch = 0 : i64, scratch_operands = 0 : i64, tpu.core_type = #tpu.core_type<tc>, window_params = [{transform_indices = @transform_0, window_bounds = array<i64: 2, 128>}, {pipeline_mode = #tpu.pipeline_mode<synchronous>, transform_indices = @transform_1, window_bounds = array<i64: 128, 256>}, {pipeline_mode = #tpu.pipeline_mode<synchronous>, transform_indices = @transform_2, window_bounds = array<i64: 1, 256>}, {pipeline_mode = #tpu.pipeline_mode<synchronous>, transform_indices = @transform_3, window_bounds = array<i64: 256, 256>}, {pipeline_mode = #tpu.pipeline_mode<synchronous>, transform_indices = @transform_4, window_bounds = array<i64: 1, 256>}, {pipeline_mode = #tpu.pipeline_mode<synchronous>, transform_indices = @transform_5, window_bounds = array<i64: 256, 64>}, {pipeline_mode = #tpu.pipeline_mode<synchronous>, transform_indices = @transform_6, window_bounds = array<i64: 1, 64>}, {transform_indices = @transform_7, window_bounds = array<i64: 2, 64>}]} {
    %c0 = arith.constant 0 : index
    %c0_0 = arith.constant 0 : index
    %0 = vector.load %arg1[%c0, %c0_0] : memref<2x128xf32, #tpu.memory_space<vmem>>, vector<2x128xf32>
    %1 = arith.truncf %0 : vector<2x128xf32> to vector<2x128xbf16>
    %c0_1 = arith.constant 0 : index
    %c0_2 = arith.constant 0 : index
    %2 = vector.load %arg2[%c0_1, %c0_2] : memref<128x256xbf16, #tpu.memory_space<vmem>>, vector<128x256xbf16>
    %cst = arith.constant dense<0.000000e+00> : vector<2x256xf32>
    %3 = tpu.matmul %1, %2, %cst {dimension_numbers = #tpu.dot_dimension_numbers<[1], [0], [0], [1], [0, 0, 1, 1], [], []>} : vector<2x128xbf16>, vector<128x256xbf16>, vector<2x256xf32> -> vector<2x256xf32>
    %c0_3 = arith.constant 0 : index
    %c0_4 = arith.constant 0 : index
    %4 = vector.load %arg3[%c0_3, %c0_4] : memref<1x256xf32, #tpu.memory_space<vmem>>, vector<1x256xf32>
    %5 = vector.broadcast %4 : vector<1x256xf32> to vector<2x256xf32>
    %6 = arith.addf %3, %5 : vector<2x256xf32>
    %cst_5 = arith.constant 0.000000e+00 : f32
    %7 = vector.broadcast %cst_5 : f32 to vector<2x256xf32>
    %8 = arith.maximumf %6, %7 : vector<2x256xf32>
    %9 = arith.truncf %8 : vector<2x256xf32> to vector<2x256xbf16>
    %c0_6 = arith.constant 0 : index
    %c0_7 = arith.constant 0 : index
    %10 = vector.load %arg4[%c0_6, %c0_7] : memref<256x256xbf16, #tpu.memory_space<vmem>>, vector<256x256xbf16>
    %cst_8 = arith.constant dense<0.000000e+00> : vector<2x256xf32>
    %11 = tpu.matmul %9, %10, %cst_8 {dimension_numbers = #tpu.dot_dimension_numbers<[1], [0], [0], [1], [0, 0, 1, 1], [], []>} : vector<2x256xbf16>, vector<256x256xbf16>, vector<2x256xf32> -> vector<2x256xf32>
    %c0_9 = arith.constant 0 : index
    %c0_10 = arith.constant 0 : index
    %12 = vector.load %arg5[%c0_9, %c0_10] : memref<1x256xf32, #tpu.memory_space<vmem>>, vector<1x256xf32>
    %13 = vector.broadcast %12 : vector<1x256xf32> to vector<2x256xf32>
    %14 = arith.addf %11, %13 : vector<2x256xf32>
    %cst_11 = arith.constant 0.000000e+00 : f32
    %15 = vector.broadcast %cst_11 : f32 to vector<2x256xf32>
    %16 = arith.maximumf %14, %15 : vector<2x256xf32>
    %17 = arith.truncf %16 : vector<2x256xf32> to vector<2x256xbf16>
    %c0_12 = arith.constant 0 : index
    %c0_13 = arith.constant 0 : index
    %18 = vector.load %arg6[%c0_12, %c0_13] : memref<256x64xbf16, #tpu.memory_space<vmem>>, vector<256x64xbf16>
    %cst_14 = arith.constant dense<0.000000e+00> : vector<2x64xf32>
    %19 = tpu.matmul %17, %18, %cst_14 {dimension_numbers = #tpu.dot_dimension_numbers<[1], [0], [0], [1], [0, 0, 1, 1], [], []>} : vector<2x256xbf16>, vector<256x64xbf16>, vector<2x64xf32> -> vector<2x64xf32>
    %c0_15 = arith.constant 0 : index
    %c0_16 = arith.constant 0 : index
    %20 = vector.load %arg7[%c0_15, %c0_16] : memref<1x64xf32, #tpu.memory_space<vmem>>, vector<1x64xf32>
    %21 = vector.broadcast %20 : vector<1x64xf32> to vector<2x64xf32>
    %22 = arith.addf %19, %21 : vector<2x64xf32>
    %c0_17 = arith.constant 0 : index
    %c0_18 = arith.constant 0 : index
    %23 = vector.load %arg8[%c0_17, %c0_18] : memref<2x64xf32, #tpu.memory_space<vmem>>, vector<2x64xf32>
    tpu.vector_store %arg8[%c0_17, %c0_18], %22 {strides = array<i32>} : memref<2x64xf32, #tpu.memory_space<vmem>>, vector<2x64xf32>,
    return
  }
  func.func @transform_0(%arg0: i32) -> (i32, i32) {
    %c0_i32 = arith.constant 0 : i32
    %c0_i32_0 = arith.constant 0 : i32
    return %arg0, %c0_i32 : i32, i32
  }
  func.func @transform_1(%arg0: i32) -> (i32, i32) {
    %c0_i32 = arith.constant 0 : i32
    %c0_i32_0 = arith.constant 0 : i32
    %c0_i32_1 = arith.constant 0 : i32
    return %c0_i32, %c0_i32_0 : i32, i32
  }
  func.func @transform_2(%arg0: i32) -> (i32, i32) {
    %c0_i32 = arith.constant 0 : i32
    %c0_i32_0 = arith.constant 0 : i32
    %c0_i32_1 = arith.constant 0 : i32
    return %c0_i32, %c0_i32_0 : i32, i32
  }
  func.func @transform_3(%arg0: i32) -> (i32, i32) {
    %c0_i32 = arith.constant 0 : i32
    %c0_i32_0 = arith.constant 0 : i32
    %c0_i32_1 = arith.constant 0 : i32
    return %c0_i32, %c0_i32_0 : i32, i32
  }
  func.func @transform_4(%arg0: i32) -> (i32, i32) {
    %c0_i32 = arith.constant 0 : i32
    %c0_i32_0 = arith.constant 0 : i32
    %c0_i32_1 = arith.constant 0 : i32
    return %c0_i32, %c0_i32_0 : i32, i32
  }
  func.func @transform_5(%arg0: i32) -> (i32, i32) {
    %c0_i32 = arith.constant 0 : i32
    %c0_i32_0 = arith.constant 0 : i32
    %c0_i32_1 = arith.constant 0 : i32
    return %c0_i32, %c0_i32_0 : i32, i32
  }
  func.func @transform_6(%arg0: i32) -> (i32, i32) {
    %c0_i32 = arith.constant 0 : i32
    %c0_i32_0 = arith.constant 0 : i32
    %c0_i32_1 = arith.constant 0 : i32
    return %c0_i32, %c0_i32_0 : i32, i32
  }
  func.func @transform_7(%arg0: i32) -> (i32, i32) {
    %c0_i32 = arith.constant 0 : i32
    %c0_i32_0 = arith.constant 0 : i32
    return %arg0, %c0_i32 : i32, i32
  }
}

</mosaic_0001>

<llo_original>
// kernel: tpu_custom_call.1
$region0: #{tpu_custom_call.1}
  #allocation0 [shape = 'u32[]', space=smem, size = 0x4, offset = 0x4, fixed_abs, tag = 'smem constant byte address 0x4 - core index']
  #allocation1 [shape = 'u32[144,128]{1,0:T(1,128)}', space=vmem, size = 0x12000, scoped, tag = 'internal scratch']
  %s0 = inlined_call_operand.vmem [shape: f32[2,128], index: 0, kind: input, shape index: {}]
  %s1 = inlined_call_operand.vmem [shape: bf16[128,256], index: 1, kind: input, shape index: {}]
  %s2 = inlined_call_operand.vmem [shape: f32[1,256], index: 2, kind: input, shape index: {}]
  %s3 = inlined_call_operand.hbm [shape: bf16[256,256], index: 3, kind: input, shape index: {}]
  %s4 = inlined_call_operand.vmem [shape: f32[1,256], index: 4, kind: input, shape index: {}]
  %s5 = inlined_call_operand.vmem [shape: bf16[256,64], index: 5, kind: input, shape index: {}]
  %s6 = inlined_call_operand.vmem [shape: f32[1,64], index: 6, kind: input, shape index: {}]
  %s7 = inlined_call_operand.hbm [shape: f32[2,64], index: 7, kind: output, shape index: {}]
  %s8 = sld [smem:[#allocation0]]
  $region42: #{tpu_custom_call.1} parent=0
    _
  %s10 = ssub.s32 1, %s8
  %s11 = scalar_select 0, %s10, %s8
  $region1: #{tpu_custom_call.1} parent=0
    #allocation2 [shape = 'u8[131072]{0}', space=vmem, size = 0x20000, scoped, tag = 'input window, operand 3, single buffered']
    #allocation3 [shape = 's32[1]{0}', space=sflag, size = 0x4, scoped, tag = 'scoped memory for tpu_custom_call.1']
    #allocation4 [shape = 's32[1]{0}', space=sflag, size = 0x4, scoped, tag = 'scoped memory for tpu_custom_call.1']
    #allocation5 [shape = 'u8[1024]{0}', space=vmem, size = 0x400, scoped, tag = 'output window, operand 0, single buffered']
    %12 = vsyncpa [#allocation3], 0
    %13 = vsyncpa [#allocation4], 0
    // Predicated region
    $region2: #{tpu_custom_call.1} parent=1 // pred_check
      _
    $region3: #{tpu_custom_call.1} parent=1 // pred_check_branch
      %15 = sbr.rel (0) target = $region5
    $region4: #{tpu_custom_call.1} parent=1 // pred_region
      _
    $region5: #{tpu_custom_call.1} parent=1 // pred_fallthru
      _
    // Predicated region
    $region6: #{tpu_custom_call.1} parent=1 // pred_check
      _
    $region7: #{tpu_custom_call.1} parent=1 // pred_check_branch
      %17 = sbr.rel (0) target = $region9
    $region8: #{tpu_custom_call.1} parent=1 // pred_region
      _
    $region9: #{tpu_custom_call.1} parent=1 // pred_fallthru
      _
    // Predicated region
    $region10: #{tpu_custom_call.1} parent=1 // pred_check
      _
    $region11: #{tpu_custom_call.1} parent=1 // pred_check_branch
      %19 = sbr.rel (0) target = $region13
    $region12: #{tpu_custom_call.1} parent=1 // pred_region
      _
    $region13: #{tpu_custom_call.1} parent=1 // pred_fallthru
      _
    // Predicated region
    $region14: #{tpu_custom_call.1} parent=1 // pred_check
      _
    $region15: #{tpu_custom_call.1} parent=1 // pred_check_branch
      %21 = sbr.rel (0) target = $region17
    $region16: #{tpu_custom_call.1} parent=1 // pred_region
      %s23 = ssub.s32 4096, 4096
      %24 = vsyncadd [#allocation3], %s23
      %s25 = sshll.u32 [#allocation2], 4
      %s26 = int_to_ptr.vmem [resolvable:$true] %s25
      %31 = dma.hbm_to_vmem [thread:$0]  %s3, 4096, %s26, [#allocation3], 128, 128, 8
    $region17: #{tpu_custom_call.1} parent=1 // pred_fallthru
      _
    // Predicated region
    $region18: #{tpu_custom_call.1} parent=1 // pred_check
      _
    $region19: #{tpu_custom_call.1} parent=1 // pred_check_branch
      %33 = sbr.rel (0) target = $region21
    $region20: #{tpu_custom_call.1} parent=1 // pred_region
      _
    $region21: #{tpu_custom_call.1} parent=1 // pred_fallthru
      _
    // Predicated region
    $region22: #{tpu_custom_call.1} parent=1 // pred_check
      _
    $region23: #{tpu_custom_call.1} parent=1 // pred_check_branch
      %35 = sbr.rel (0) target = $region25
    $region24: #{tpu_custom_call.1} parent=1 // pred_region
      _
    $region25: #{tpu_custom_call.1} parent=1 // pred_fallthru
      _
    // Predicated region
    $region26: #{tpu_custom_call.1} parent=1 // pred_check
      _
    $region27: #{tpu_custom_call.1} parent=1 // pred_check_branch
      %37 = sbr.rel (0) target = $region29
    $region28: #{tpu_custom_call.1} parent=1 // pred_region
      _
    $region29: #{tpu_custom_call.1} parent=1 // pred_fallthru
      _
    // Predicated region
    $region30: #{tpu_custom_call.1} parent=1 // pred_check
      _
    $region31: #{tpu_custom_call.1} parent=1 // pred_check_branch
      %39 = sbr.rel (0) target = $region33
    $region32: #{tpu_custom_call.1} parent=1 // pred_region
      %40 = dma.done [#allocation3], 4096
    $region33: #{tpu_custom_call.1} parent=1 // pred_fallthru
      _
    %v42 = vld [vmem:[%s0] sm:$0x3]
    %v43 = vpack.c.bf16 %v42, %v42
    %v44 = vld [vmem:[%s1] sm:$0xff]
    %v45 = vld [vmem:[%s1 + $0x8] sm:$0xff]
    %v46 = vld [vmem:[%s1 + $0x10] sm:$0xff]
    %v47 = vld [vmem:[%s1 + $0x18] sm:$0xff]
    %v48 = vld [vmem:[%s1 + $0x20] sm:$0xff]
    %v49 = vld [vmem:[%s1 + $0x28] sm:$0xff]
    %v50 = vld [vmem:[%s1 + $0x30] sm:$0xff]
    %v51 = vld [vmem:[%s1 + $0x38] sm:$0xff]
    %v52 = vld [vmem:[%s1 + $0x40] sm:$0xff]
    %v53 = vld [vmem:[%s1 + $0x48] sm:$0xff]
    %v54 = vld [vmem:[%s1 + $0x50] sm:$0xff]
    %v55 = vld [vmem:[%s1 + $0x58] sm:$0xff]
    %v56 = vld [vmem:[%s1 + $0x60] sm:$0xff]
    %v57 = vld [vmem:[%s1 + $0x68] sm:$0xff]
    %v58 = vld [vmem:[%s1 + $0x70] sm:$0xff]
    %v59 = vld [vmem:[%s1 + $0x78] sm:$0xff]
    %v60 = vld [vmem:[%s2] sm:$0x3]
    %v62 = vlaneseq
    %v63 = vshrl.u32 %v62, 7
    %v64 = vsub.s32 0, %v63
    %v65 = vrot.slane %v60, %v64
    %v66 = vlaneseq
    %v67 = vshrl.u32 %v66, 7
    %v68 = vsub.s32 1, %v67
    %v69 = vrot.slane %v60, %v68
    %v88 = vunpack.c.l.b16 %v44
    %v89 = vunpack.c.h.b16 %v44
    %v90 = vunpack.c.l.b16 %v45
    %v91 = vunpack.c.h.b16 %v45
    %v92 = vunpack.c.l.b16 %v46
    %v93 = vunpack.c.h.b16 %v46
    %v94 = vunpack.c.l.b16 %v47
    %v95 = vunpack.c.h.b16 %v47
    %v96 = vunpack.c.l.b16 %v48
    %v97 = vunpack.c.h.b16 %v48
    %v98 = vunpack.c.l.b16 %v49
    %v99 = vunpack.c.h.b16 %v49
    %v100 = vunpack.c.l.b16 %v50
    %v101 = vunpack.c.h.b16 %v50
    %v102 = vunpack.c.l.b16 %v51
    %v103 = vunpack.c.h.b16 %v51
    %v104 = vunpack.c.l.b16 %v52
    %v105 = vunpack.c.h.b16 %v52
    %v106 = vunpack.c.l.b16 %v53
    %v107 = vunpack.c.h.b16 %v53
    %v108 = vunpack.c.l.b16 %v54
    %v109 = vunpack.c.h.b16 %v54
    %v110 = vunpack.c.l.b16 %v55
    %v111 = vunpack.c.h.b16 %v55
    %v112 = vunpack.c.l.b16 %v56
    %v113 = vunpack.c.h.b16 %v56
    %v114 = vunpack.c.l.b16 %v57
    %v115 = vunpack.c.h.b16 %v57
    %v116 = vunpack.c.l.b16 %v58
    %v117 = vunpack.c.h.b16 %v58
    %v118 = vunpack.c.l.b16 %v59
    %v119 = vunpack.c.h.b16 %v59
    %v120 = vpack.c.b16 %v90, %v88
    %v121 = vpack.c.b16 %v91, %v89
    %v122 = vpack.c.b16 %v94, %v92
    %v123 = vpack.c.b16 %v95, %v93
    %v124 = vpack.c.b16 %v98, %v96
    %v125 = vpack.c.b16 %v99, %v97
    %v126 = vpack.c.b16 %v102, %v100
    %v127 = vpack.c.b16 %v103, %v101
    %v128 = vpack.c.b16 %v106, %v104
    %v129 = vpack.c.b16 %v107, %v105
    %v130 = vpack.c.b16 %v110, %v108
    %v131 = vpack.c.b16 %v111, %v109
    %v132 = vpack.c.b16 %v114, %v112
    %v133 = vpack.c.b16 %v115, %v113
    %v134 = vpack.c.b16 %v118, %v116
    %v135 = vpack.c.b16 %v119, %v117
    %152 = vmatprep.subr.bf16.mxu0 %v121
    %153 = vmatpush1.bf16.msra.mxu0 %v120
    %154 = vmatprep.subr.bf16.mxu0 %v123
    %155 = vmatpush1.bf16.msra.mxu0 %v122
    %156 = vmatprep.subr.bf16.mxu0 %v125
    %157 = vmatpush1.bf16.msra.mxu0 %v124
    %158 = vmatprep.subr.bf16.mxu0 %v127
    %159 = vmatpush1.bf16.msra.mxu0 %v126
    %160 = vmatprep.subr.bf16.mxu0 %v129
    %161 = vmatpush1.bf16.msra.mxu0 %v128
    %162 = vmatprep.subr.bf16.mxu0 %v131
    %163 = vmatpush1.bf16.msra.mxu0 %v130
    %164 = vmatprep.subr.bf16.mxu0 %v133
    %165 = vmatpush1.bf16.msra.mxu0 %v132
    %166 = vmatprep.subr.bf16.mxu0 %v135
    %167 = vmatpush1.bf16.msra.mxu0 %v134
    %168 = vmatprep.subr.bf16.mxu0 0
    %169 = vmatpush1.bf16.msra.mxu0 0
    %170 = vmatprep.subr.bf16.mxu0 0
    %171 = vmatpush1.bf16.msra.mxu0 0
    %172 = vmatprep.subr.bf16.mxu0 0
    %173 = vmatpush1.bf16.msra.mxu0 0
    %174 = vmatprep.subr.bf16.mxu0 0
    %175 = vmatpush1.bf16.msra.mxu0 0
    %176 = vmatprep.subr.bf16.mxu0 0
    %177 = vmatpush1.bf16.msra.mxu0 0
    %178 = vmatprep.subr.bf16.mxu0 0
    %179 = vmatpush1.bf16.msra.mxu0 0
    %180 = vmatprep.subr.bf16.mxu0 0
    %181 = vmatpush1.bf16.msra.mxu0 0
    %182 = vmatprep.subr.bf16.mxu0 0
    %183 = vmatpush1.bf16.msra.mxu0 0
    %184 = vmatprep.mubr.bf16.mxu0 0
    %185 = vmatmul.mubr.bf16.gmra.mrb[0].mxu0 %v43
    %v186 = vpop.f32.mrb[0].mxu0
    %v187 = vadd.f32 %v65, %v186
    %v188 = vpop.f32.mrb[0].mxu0
    %v189 = vadd.f32 %v69, %v188
    %v190 = vpop.f32.mrb[0].mxu0
    %v191 = vpop.f32.mrb[0].mxu0
    %192 = vdwg.mxu0
    %v193 = vmax.f32 %v187, 0.0
    %v194 = vmax.f32 %v189, 0.0
    %v195 = vpack.c.bf16 %v193, %v193
    %v196 = vpack.c.bf16 %v194, %v194
    %v197 = vld [vmem:[#allocation2] sm:$0xff]
    %v198 = vld [vmem:[#allocation2 + $0x8] sm:$0xff]
    %v199 = vld [vmem:[#allocation2 + $0x10] sm:$0xff]
    %v200 = vld [vmem:[#allocation2 + $0x18] sm:$0xff]
    %v201 = vld [vmem:[#allocation2 + $0x20] sm:$0xff]
    %v202 = vld [vmem:[#allocation2 + $0x28] sm:$0xff]
    %v203 = vld [vmem:[#allocation2 + $0x30] sm:$0xff]
    %v204 = vld [vmem:[#allocation2 + $0x38] sm:$0xff]
    %v205 = vld [vmem:[#allocation2 + $0x40] sm:$0xff]
    %v206 = vld [vmem:[#allocation2 + $0x48] sm:$0xff]
    %v207 = vld [vmem:[#allocation2 + $0x50] sm:$0xff]
    %v208 = vld [vmem:[#allocation2 + $0x58] sm:$0xff]
    %v209 = vld [vmem:[#allocation2 + $0x60] sm:$0xff]
    %v210 = vld [vmem:[#allocation2 + $0x68] sm:$0xff]
    %v211 = vld [vmem:[#allocation2 + $0x70] sm:$0xff]
    %v212 = vld [vmem:[#allocation2 + $0x78] sm:$0xff]
    %v213 = vld [vmem:[#allocation2 + $0x80] sm:$0xff]
    %v214 = vld [vmem:[#allocation2 + $0x88] sm:$0xff]
    %v215 = vld [vmem:[#allocation2 + $0x90] sm:$0xff]
    %v216 = vld [vmem:[#allocation2 + $0x98] sm:$0xff]
    %v217 = vld [vmem:[#allocation2 + $0xa0] sm:$0xff]
    %v218 = vld [vmem:[#allocation2 + $0xa8] sm:$0xff]
    %v219 = vld [vmem:[#allocation2 + $0xb0] sm:$0xff]
    %v220 = vld [vmem:[#allocation2 + $0xb8] sm:$0xff]
    %v221 = vld [vmem:[#allocation2 + $0xc0] sm:$0xff]
    %v222 = vld [vmem:[#allocation2 + $0xc8] sm:$0xff]
    %v223 = vld [vmem:[#allocation2 + $0xd0] sm:$0xff]
    %v224 = vld [vmem:[#allocation2 + $0xd8] sm:$0xff]
    %v225 = vld [vmem:[#allocation2 + $0xe0] sm:$0xff]
    %v226 = vld [vmem:[#allocation2 + $0xe8] sm:$0xff]
    %v227 = vld [vmem:[#allocation2 + $0xf0] sm:$0xff]
    %v228 = vld [vmem:[#allocation2 + $0xf8] sm:$0xff]
    %v229 = vld [vmem:[%s4] sm:$0x3]
    %v231 = vlaneseq
    %v232 = vshrl.u32 %v231, 7
    %v233 = vsub.s32 0, %v232
    %v234 = vrot.slane %v229, %v233
    %v235 = vlaneseq
    %v236 = vshrl.u32 %v235, 7
    %v237 = vsub.s32 1, %v236
    %v238 = vrot.slane %v229, %v237
    %v273 = vunpack.c.l.b16 %v197
    %v274 = vunpack.c.h.b16 %v197
    %v275 = vunpack.c.l.b16 %v198
    %v276 = vunpack.c.h.b16 %v198
    %v277 = vunpack.c.l.b16 %v199
    %v278 = vunpack.c.h.b16 %v199
    %v279 = vunpack.c.l.b16 %v200
    %v280 = vunpack.c.h.b16 %v200
    %v281 = vunpack.c.l.b16 %v201
    %v282 = vunpack.c.h.b16 %v201
    %v283 = vunpack.c.l.b16 %v202
    %v284 = vunpack.c.h.b16 %v202
    %v285 = vunpack.c.l.b16 %v203
    %v286 = vunpack.c.h.b16 %v203
    %v287 = vunpack.c.l.b16 %v204
    %v288 = vunpack.c.h.b16 %v204
    %v289 = vunpack.c.l.b16 %v205
    %v290 = vunpack.c.h.b16 %v205
    %v291 = vunpack.c.l.b16 %v206
    %v292 = vunpack.c.h.b16 %v206
    %v293 = vunpack.c.l.b16 %v207
    %v294 = vunpack.c.h.b16 %v207
    %v295 = vunpack.c.l.b16 %v208
    %v296 = vunpack.c.h.b16 %v208
    %v297 = vunpack.c.l.b16 %v209
    %v298 = vunpack.c.h.b16 %v209
    %v299 = vunpack.c.l.b16 %v210
    %v300 = vunpack.c.h.b16 %v210
    %v301 = vunpack.c.l.b16 %v211
    %v302 = vunpack.c.h.b16 %v211
    %v303 = vunpack.c.l.b16 %v212
    %v304 = vunpack.c.h.b16 %v212
    %v305 = vunpack.c.l.b16 %v213
    %v306 = vunpack.c.h.b16 %v213
    %v307 = vunpack.c.l.b16 %v214
    %v308 = vunpack.c.h.b16 %v214
    %v309 = vunpack.c.l.b16 %v215
    %v310 = vunpack.c.h.b16 %v215
    %v311 = vunpack.c.l.b16 %v216
    %v312 = vunpack.c.h.b16 %v216
    %v313 = vunpack.c.l.b16 %v217
    %v314 = vunpack.c.h.b16 %v217
    %v315 = vunpack.c.l.b16 %v218
    %v316 = vunpack.c.h.b16 %v218
    %v317 = vunpack.c.l.b16 %v219
    %v318 = vunpack.c.h.b16 %v219
    %v319 = vunpack.c.l.b16 %v220
    %v320 = vunpack.c.h.b16 %v220
    %v321 = vunpack.c.l.b16 %v221
    %v322 = vunpack.c.h.b16 %v221
    %v323 = vunpack.c.l.b16 %v222
    %v324 = vunpack.c.h.b16 %v222
    %v325 = vunpack.c.l.b16 %v223
    %v326 = vunpack.c.h.b16 %v223
    %v327 = vunpack.c.l.b16 %v224
    %v328 = vunpack.c.h.b16 %v224
    %v329 = vunpack.c.l.b16 %v225
    %v330 = vunpack.c.h.b16 %v225
    %v331 = vunpack.c.l.b16 %v226
    %v332 = vunpack.c.h.b16 %v226
    %v333 = vunpack.c.l.b16 %v227
    %v334 = vunpack.c.h.b16 %v227
    %v335 = vunpack.c.l.b16 %v228
    %v336 = vunpack.c.h.b16 %v228
    %v337 = vpack.c.b16 %v275, %v273
    %v338 = vpack.c.b16 %v276, %v274
    %v339 = vpack.c.b16 %v279, %v277
    %v340 = vpack.c.b16 %v280, %v278
    %v341 = vpack.c.b16 %v283, %v281
    %v342 = vpack.c.b16 %v284, %v282
    %v343 = vpack.c.b16 %v287, %v285
    %v344 = vpack.c.b16 %v288, %v286
    %v345 = vpack.c.b16 %v291, %v289
    %v346 = vpack.c.b16 %v292, %v290
    %v347 = vpack.c.b16 %v295, %v293
    %v348 = vpack.c.b16 %v296, %v294
    %v349 = vpack.c.b16 %v299, %v297
    %v350 = vpack.c.b16 %v300, %v298
    %v351 = vpack.c.b16 %v303, %v301
    %v352 = vpack.c.b16 %v304, %v302
    %v353 = vpack.c.b16 %v307, %v305
    %v354 = vpack.c.b16 %v308, %v306
    %v355 = vpack.c.b16 %v311, %v309
    %v356 = vpack.c.b16 %v312, %v310
    %v357 = vpack.c.b16 %v315, %v313
    %v358 = vpack.c.b16 %v316, %v314
    %v359 = vpack.c.b16 %v319, %v317
    %v360 = vpack.c.b16 %v320, %v318
    %v361 = vpack.c.b16 %v323, %v321
    %v362 = vpack.c.b16 %v324, %v322
    %v363 = vpack.c.b16 %v327, %v325
    %v364 = vpack.c.b16 %v328, %v326
    %v365 = vpack.c.b16 %v331, %v329
    %v366 = vpack.c.b16 %v332, %v330
    %v367 = vpack.c.b16 %v335, %v333
    %v368 = vpack.c.b16 %v336, %v334
    %401 = vmatprep.subr.bf16.mxu0 %v338
    %402 = vmatpush1.bf16.msra.mxu0 %v337
    %403 = vmatprep.subr.bf16.mxu0 %v340
    %404 = vmatpush1.bf16.msra.mxu0 %v339
    %405 = vmatprep.subr.bf16.mxu0 %v342
    %406 = vmatpush1.bf16.msra.mxu0 %v341
    %407 = vmatprep.subr.bf16.mxu0 %v344
    %408 = vmatpush1.bf16.msra.mxu0 %v343
    %409 = vmatprep.subr.bf16.mxu0 %v346
    %410 = vmatpush1.bf16.msra.mxu0 %v345
    %411 = vmatprep.subr.bf16.mxu0 %v348
    %412 = vmatpush1.bf16.msra.mxu0 %v347
    %413 = vmatprep.subr.bf16.mxu0 %v350
    %414 = vmatpush1.bf16.msra.mxu0 %v349
    %415 = vmatprep.subr.bf16.mxu0 %v352
    %416 = vmatpush1.bf16.msra.mxu0 %v351
    %417 = vmatprep.subr.bf16.mxu0 %v354
    %418 = vmatpush1.bf16.msra.mxu0 %v353
    %419 = vmatprep.subr.bf16.mxu0 %v356
    %420 = vmatpush1.bf16.msra.mxu0 %v355
    %421 = vmatprep.subr.bf16.mxu0 %v358
    %422 = vmatpush1.bf16.msra.mxu0 %v357
    %423 = vmatprep.subr.bf16.mxu0 %v360
    %424 = vmatpush1.bf16.msra.mxu0 %v359
    %425 = vmatprep.subr.bf16.mxu0 %v362
    %426 = vmatpush1.bf16.msra.mxu0 %v361
    %427 = vmatprep.subr.bf16.mxu0 %v364
    %428 = vmatpush1.bf16.msra.mxu0 %v363
    %429 = vmatprep.subr.bf16.mxu0 %v366
    %430 = vmatpush1.bf16.msra.mxu0 %v365
    %431 = vmatprep.subr.bf16.mxu0 %v368
    %432 = vmatpush1.bf16.msra.mxu0 %v367
    %433 = vmatprep.mubr.bf16.mxu0 %v196
    %434 = vmatmul.mubr.bf16.gmra.mrb[0].mxu0 %v195
    %v435 = vpop.f32.mrb[0].mxu0
    %v436 = vadd.f32 %v234, %v435
    %v437 = vpop.f32.mrb[0].mxu0
    %v438 = vadd.f32 %v238, %v437
    %v439 = vpop.f32.mrb[0].mxu0
    %v440 = vpop.f32.mrb[0].mxu0
    %441 = vdwg.mxu0
    %v442 = vmax.f32 %v436, 0.0
    %v443 = vmax.f32 %v438, 0.0
    %v444 = vpack.c.bf16 %v442, %v442
    %v445 = vpack.c.bf16 %v443, %v443
    %v446 = vld [vmem:[%s5] sm:$0xf]
    %v447 = vld [vmem:[%s5 + $0x4] sm:$0xf]
    %v448 = vld [vmem:[%s5 + $0x8] sm:$0xf]
    %v449 = vld [vmem:[%s5 + $0xc] sm:$0xf]
    %v450 = vld [vmem:[%s5 + $0x10] sm:$0xf]
    %v451 = vld [vmem:[%s5 + $0x14] sm:$0xf]
    %v452 = vld [vmem:[%s5 + $0x18] sm:$0xf]
    %v453 = vld [vmem:[%s5 + $0x1c] sm:$0xf]
    %v454 = vld [vmem:[%s5 + $0x20] sm:$0xf]
    %v455 = vld [vmem:[%s5 + $0x24] sm:$0xf]
    %v456 = vld [vmem:[%s5 + $0x28] sm:$0xf]
    %v457 = vld [vmem:[%s5 + $0x2c] sm:$0xf]
    %v458 = vld [vmem:[%s5 + $0x30] sm:$0xf]
    %v459 = vld [vmem:[%s5 + $0x34] sm:$0xf]
    %v460 = vld [vmem:[%s5 + $0x38] sm:$0xf]
    %v461 = vld [vmem:[%s5 + $0x3c] sm:$0xf]
    %v462 = vld [vmem:[%s5 + $0x40] sm:$0xf]
    %v463 = vld [vmem:[%s5 + $0x44] sm:$0xf]
    %v464 = vld [vmem:[%s5 + $0x48] sm:$0xf]
    %v465 = vld [vmem:[%s5 + $0x4c] sm:$0xf]
    %v466 = vld [vmem:[%s5 + $0x50] sm:$0xf]
    %v467 = vld [vmem:[%s5 + $0x54] sm:$0xf]
    %v468 = vld [vmem:[%s5 + $0x58] sm:$0xf]
    %v469 = vld [vmem:[%s5 + $0x5c] sm:$0xf]
    %v470 = vld [vmem:[%s5 + $0x60] sm:$0xf]
    %v471 = vld [vmem:[%s5 + $0x64] sm:$0xf]
    %v472 = vld [vmem:[%s5 + $0x68] sm:$0xf]
    %v473 = vld [vmem:[%s5 + $0x6c] sm:$0xf]
    %v474 = vld [vmem:[%s5 + $0x70] sm:$0xf]
    %v475 = vld [vmem:[%s5 + $0x74] sm:$0xf]
    %v476 = vld [vmem:[%s5 + $0x78] sm:$0xf]
    %v477 = vld [vmem:[%s5 + $0x7c] sm:$0xf]
    %v478 = vld [vmem:[%s6] sm:$0x1]
    %v480 = vlaneseq
    %v481 = vshrl.u32 %v480, 7
    %v482 = vsub.s32 0, %v481
    %v483 = vrot.slane %v478, %v482
    %v517 = vunpack.c.l.b16 %v446
    %v518 = vunpack.c.l.b16 %v447
    %v519 = vunpack.c.l.b16 %v448
    %v520 = vunpack.c.l.b16 %v449
    %v521 = vunpack.c.l.b16 %v450
    %v522 = vunpack.c.l.b16 %v451
    %v523 = vunpack.c.l.b16 %v452
    %v524 = vunpack.c.l.b16 %v453
    %v525 = vunpack.c.l.b16 %v454
    %v526 = vunpack.c.l.b16 %v455
    %v527 = vunpack.c.l.b16 %v456
    %v528 = vunpack.c.l.b16 %v457
    %v529 = vunpack.c.l.b16 %v458
    %v530 = vunpack.c.l.b16 %v459
    %v531 = vunpack.c.l.b16 %v460
    %v532 = vunpack.c.l.b16 %v461
    %v533 = vunpack.c.l.b16 %v462
    %v534 = vunpack.c.l.b16 %v463
    %v535 = vunpack.c.l.b16 %v464
    %v536 = vunpack.c.l.b16 %v465
    %v537 = vunpack.c.l.b16 %v466
    %v538 = vunpack.c.l.b16 %v467
    %v539 = vunpack.c.l.b16 %v468
    %v540 = vunpack.c.l.b16 %v469
    %v541 = vunpack.c.l.b16 %v470
    %v542 = vunpack.c.l.b16 %v471
    %v543 = vunpack.c.l.b16 %v472
    %v544 = vunpack.c.l.b16 %v473
    %v545 = vunpack.c.l.b16 %v474
    %v546 = vunpack.c.l.b16 %v475
    %v547 = vunpack.c.l.b16 %v476
    %v548 = vunpack.c.l.b16 %v477
    %v549 = vpack.c.b16 %v518, %v517
    %v550 = vpack.c.b16 %v520, %v519
    %v551 = vpack.c.b16 %v522, %v521
    %v552 = vpack.c.b16 %v524, %v523
    %v553 = vpack.c.b16 %v526, %v525
    %v554 = vpack.c.b16 %v528, %v527
    %v555 = vpack.c.b16 %v530, %v529
    %v556 = vpack.c.b16 %v532, %v531
    %v557 = vpack.c.b16 %v534, %v533
    %v558 = vpack.c.b16 %v536, %v535
    %v559 = vpack.c.b16 %v538, %v537
    %v560 = vpack.c.b16 %v540, %v539
    %v561 = vpack.c.b16 %v542, %v541
    %v562 = vpack.c.b16 %v544, %v543
    %v563 = vpack.c.b16 %v546, %v545
    %v564 = vpack.c.b16 %v548, %v547
    %581 = vmatprep.subr.bf16.mxu0 0
    %582 = vmatpush1.bf16.msra.mxu0 %v549
    %583 = vmatprep.subr.bf16.mxu0 0
    %584 = vmatpush1.bf16.msra.mxu0 %v550
    %585 = vmatprep.subr.bf16.mxu0 0
    %586 = vmatpush1.bf16.msra.mxu0 %v551
    %587 = vmatprep.subr.bf16.mxu0 0
    %588 = vmatpush1.bf16.msra.mxu0 %v552
    %589 = vmatprep.subr.bf16.mxu0 0
    %590 = vmatpush1.bf16.msra.mxu0 %v553
    %591 = vmatprep.subr.bf16.mxu0 0
    %592 = vmatpush1.bf16.msra.mxu0 %v554
    %593 = vmatprep.subr.bf16.mxu0 0
    %594 = vmatpush1.bf16.msra.mxu0 %v555
    %595 = vmatprep.subr.bf16.mxu0 0
    %596 = vmatpush1.bf16.msra.mxu0 %v556
    %597 = vmatprep.subr.bf16.mxu0 0
    %598 = vmatpush1.bf16.msra.mxu0 %v557
    %599 = vmatprep.subr.bf16.mxu0 0
    %600 = vmatpush1.bf16.msra.mxu0 %v558
    %601 = vmatprep.subr.bf16.mxu0 0
    %602 = vmatpush1.bf16.msra.mxu0 %v559
    %603 = vmatprep.subr.bf16.mxu0 0
    %604 = vmatpush1.bf16.msra.mxu0 %v560
    %605 = vmatprep.subr.bf16.mxu0 0
    %606 = vmatpush1.bf16.msra.mxu0 %v561
    %607 = vmatprep.subr.bf16.mxu0 0
    %608 = vmatpush1.bf16.msra.mxu0 %v562
    %609 = vmatprep.subr.bf16.mxu0 0
    %610 = vmatpush1.bf16.msra.mxu0 %v563
    %611 = vmatprep.subr.bf16.mxu0 0
    %612 = vmatpush1.bf16.msra.mxu0 %v564
    %613 = vmatprep.mubr.bf16.mxu0 %v445
    %614 = vmatmul.mubr.bf16.gmra.mrb[0].mxu0 %v444
    %v615 = vpop.f32.mrb[0].mxu0
    %v616 = vadd.f32 %v483, %v615
    %v617 = vpop.f32.mrb[0].mxu0
    %v618 = vpop.f32.mrb[0].mxu0
    %v619 = vpop.f32.mrb[0].mxu0
    %620 = vdwg.mxu0
    %vm621 = vcmask 517120
    %622 = vst.msk [vmem:[#allocation5] sm:$0x3] %vm621, %v616
    // Predicated region
    $region34: #{tpu_custom_call.1} parent=1 // pred_check
      _
    $region35: #{tpu_custom_call.1} parent=1 // pred_check_branch
      %624 = sbr.rel (0) target = $region37
    $region36: #{tpu_custom_call.1} parent=1 // pred_region
      %s626 = ssub.s32 32, 32
      %627 = vsyncadd [#allocation4], %s626
      %s629 = sshll.u32 [#allocation5], 4
      %s630 = int_to_ptr.vmem [resolvable:$true] %s629
      %632 = dma.vmem_to_hbm [thread:$0]  %s630, 32, %s7, [#allocation4]
    $region37: #{tpu_custom_call.1} parent=1 // pred_fallthru
      _
    // Predicated region
    $region38: #{tpu_custom_call.1} parent=1 // pred_check
      _
    $region39: #{tpu_custom_call.1} parent=1 // pred_check_branch
      %634 = sbr.rel (0) target = $region41
    $region40: #{tpu_custom_call.1} parent=1 // pred_region
      %635 = dma.done [#allocation4], 32
    $region41: #{tpu_custom_call.1} parent=1 // pred_fallthru
      _
    %636 = vsyncpa [#allocation3], 1
    %637 = vsyncpa [#allocation4], 1

</llo_original>
